<compile_context>
chip_gen: v7x
topology: tpu7x:2x2x1
jax: 0.10.0
libtpu: 0.0.40
codegen_flags: <defaults>
</compile_context>

<pallas_src>
import functools

import jax
import jax.numpy as jnp
from jax.experimental import pallas as pl
from jax.experimental.pallas import tpu as pltpu


def _mlp_kernel(xT_ref,
                w1_ref, b1_ref,
                w2_ref, b2_ref,
                w3_ref, b3_ref,
                w4_ref, b4_ref,
                o_ref,
                *, apply_output_relu):
    """Fused 4-layer MLP on one (features, TILE_B) batch tile."""
    xT = xT_ref[...]                                               # (d, TB) bf16

    h = jnp.dot(w1_ref[...], xT, preferred_element_type=jnp.float32)
    h = jnp.maximum(h + b1_ref[...], 0.0)                          # ReLU (+ identity dropout)
    h = h.astype(jnp.bfloat16)

    h = jnp.dot(w2_ref[...], h, preferred_element_type=jnp.float32)
    h = jnp.maximum(h + b2_ref[...], 0.0)
    h = h.astype(jnp.bfloat16)

    h = jnp.dot(w3_ref[...], h, preferred_element_type=jnp.float32)
    h = jnp.maximum(h + b3_ref[...], 0.0)                          # (64, TB) f32

    # Layer 4 has a single output feature: VPU multiply + sublane reduce
    # instead of an MXU pass with 1/128 lane utilization.
    y = jnp.sum(h * w4_ref[...], axis=0, keepdims=True) + b4_ref[...]   # (1, TB)
    if apply_output_relu:
        y = jnp.maximum(y, 0.0)

    o_ref[...] = y.astype(o_ref.dtype)                             # lane-dense store


def mlp_forward(x, params, output="relu", tile_b=512):
    """x: (B, d) float32. Returns (B, 1) float32."""
    B, d = x.shape

    # Batch tile: multiple of 128 lanes; small batches collapse to one tile.
    tile_b = max(128, (min(tile_b, max(B, 1)) + 127) // 128 * 128)
    B_pad = (B + tile_b - 1) // tile_b * tile_b
    grid = (B_pad // tile_b,)

    # Pad batch and transpose so batch maps to lanes; bf16 halves the x DMA.
    xT = jnp.pad(x, ((0, B_pad - B), (0, 0))).astype(jnp.bfloat16).T   # (d, B_pad)

    w1, b1 = params["w1"], params["b1"]
    w2, b2 = params["w2"], params["b2"]
    w3, b3 = params["w3"], params["b3"]
    w4, b4 = params["w4"], params["b4"]

    x_map = lambda i: (0, i)          # tile over batch (lanes)
    const_map = lambda i: (0, 0)      # weights/biases resident across steps
    full = lambda a: pl.BlockSpec(a.shape, const_map)

    in_specs = [pl.BlockSpec((d, tile_b), x_map),
                full(w1), full(b1), full(w2), full(b2),
                full(w3), full(b3), full(w4), full(b4)]
    out_spec = pl.BlockSpec((1, tile_b), x_map)

    flops = 2 * B_pad * (d * 64 + 64 * 128 + 128 * 64 + 64)
    bytes_accessed = int(
        xT.size * xT.dtype.itemsize            # x read
        + 4 * B_pad                            # f32 output write
        + sum(int(p.size) * p.dtype.itemsize
              for p in (w1, b1, w2, b2, w3, b3, w4, b4)))

    kernel = functools.partial(_mlp_kernel,
                               apply_output_relu=(output == "relu"))
    out = pl.pallas_call(
        kernel,
        out_shape=jax.ShapeDtypeStruct((1, B_pad), jnp.float32),
        grid=grid,
        in_specs=in_specs,
        out_specs=out_spec,
        compiler_params=pltpu.CompilerParams(
            dimension_semantics=("parallel",),      # shards batch tiles on v7x 2-TC
            vmem_limit_bytes=32 * 1024 * 1024),
        cost_estimate=pl.CostEstimate(
            flops=flops, transcendentals=0, bytes_accessed=bytes_accessed),
    )(xT, w1, b1, w2, b2, w3, b3, w4, b4)

    return out[0, :B].reshape(B, 1)


def init_params(key, d):
    """Parameters in the kernel's layout:
       w1..w3: (out, in) bf16 (MXU operands), w4: (in, 1) f32 (VPU reduce),
       biases: (out, 1) f32. Init range matches torch nn.Linear defaults."""
    layer_dims = [(d, 64), (64, 128), (128, 64), (64, 1)]
    params = {}
    for i, (fan_in, fan_out) in enumerate(layer_dims, start=1):
        key, kw, kb = jax.random.split(key, 3)
        bound = 1.0 / jnp.sqrt(fan_in)
        w = jax.random.uniform(kw, (fan_out, fan_in), jnp.float32, -bound, bound)
        b = jax.random.uniform(kb, (fan_out, 1), jnp.float32, -bound, bound)
        params[f"w{i}"] = w.astype(jnp.bfloat16) if i < 4 else w.T   # w4 -> (64, 1) f32
        params[f"b{i}"] = b
    return params


def reference_forward(x, params, output="relu"):
    """Pure-JAX reference mirroring the kernel's mixed precision
       (bf16 matmul operands, f32 accumulation)."""
    h = x.astype(jnp.bfloat16)
    h = jnp.maximum(
        jnp.dot(h, params["w1"].T, preferred_element_type=jnp.float32)
        + params["b1"].T, 0.0)
    h = jnp.maximum(
        jnp.dot(h.astype(jnp.bfloat16), params["w2"].T,
                preferred_element_type=jnp.float32) + params["b2"].T, 0.0)
    h = jnp.maximum(
        jnp.dot(h.astype(jnp.bfloat16), params["w3"].T,
                preferred_element_type=jnp.float32) + params["b3"].T, 0.0)
    y = jnp.dot(h, params["w4"]) + params["b4"].T                   # (B, 1)
    if output == "relu":
        y = jnp.maximum(y, 0.0)
    return y


if __name__ == "__main__":
    key = jax.random.PRNGKey(0)
    B, d = 8, 32
    key, kx = jax.random.split(key)
    x = jax.random.normal(kx, (B, d), jnp.float32)
    params = init_params(key, d)

    out_relu = jax.block_until_ready(mlp_forward(x, params, output="relu"))
    out_lin = jax.block_until_ready(mlp_forward(x, params, output="linear"))

    ref_relu = reference_forward(x, params, output="relu")
    ref_lin = reference_forward(x, params, output="linear")

    assert out_relu.shape == (B, 1) and out_lin.shape == (B, 1)
    assert jnp.allclose(out_relu, ref_relu, atol=2e-3, rtol=2e-3)
    assert jnp.allclose(out_lin, ref_lin, atol=2e-3, rtol=2e-3)

    print("KERNEL_OK")
</pallas_src>

<mosaic_0001>
module attributes {stable_mosaic.version = 11 : i64} {
  func.func @_mlp_kernel(%arg0: i32, %arg1: memref<32x128xbf16, #tpu.memory_space<vmem>>, %arg2: memref<64x32xbf16, #tpu.memory_space<vmem>>, %arg3: memref<64x1xf32, #tpu.memory_space<vmem>>, %arg4: memref<128x64xbf16, #tpu.memory_space<vmem>>, %arg5: memref<128x1xf32, #tpu.memory_space<vmem>>, %arg6: memref<64x128xbf16, #tpu.memory_space<vmem>>, %arg7: memref<64x1xf32, #tpu.memory_space<vmem>>, %arg8: memref<64x1xf32, #tpu.memory_space<vmem>>, %arg9: memref<1x1xf32, #tpu.memory_space<vmem>>, %arg10: memref<1x128xf32, #tpu.memory_space<vmem>>) attributes {dimension_semantics = [#tpu.dimension_semantics<parallel>], iteration_bounds = array<i64: 1>, scalar_prefetch = 0 : i64, scratch_operands = 0 : i64, tpu.core_type = #tpu.core_type<tc>, window_params = [{transform_indices = @transform_0, window_bounds = array<i64: 32, 128>}, {pipeline_mode = #tpu.pipeline_mode<synchronous>, transform_indices = @transform_1, window_bounds = array<i64: 64, 32>}, {pipeline_mode = #tpu.pipeline_mode<synchronous>, transform_indices = @transform_2, window_bounds = array<i64: 64, 1>}, {pipeline_mode = #tpu.pipeline_mode<synchronous>, transform_indices = @transform_3, window_bounds = array<i64: 128, 64>}, {pipeline_mode = #tpu.pipeline_mode<synchronous>, transform_indices = @transform_4, window_bounds = array<i64: 128, 1>}, {pipeline_mode = #tpu.pipeline_mode<synchronous>, transform_indices = @transform_5, window_bounds = array<i64: 64, 128>}, {pipeline_mode = #tpu.pipeline_mode<synchronous>, transform_indices = @transform_6, window_bounds = array<i64: 64, 1>}, {pipeline_mode = #tpu.pipeline_mode<synchronous>, transform_indices = @transform_7, window_bounds = array<i64: 64, 1>}, {pipeline_mode = #tpu.pipeline_mode<synchronous>, transform_indices = @transform_8, window_bounds = array<i64: 1, 1>}, {transform_indices = @transform_9, window_bounds = array<i64: 1, 128>}]} {
    %c0 = arith.constant 0 : index
    %c0_0 = arith.constant 0 : index
    %0 = vector.load %arg1[%c0, %c0_0] : memref<32x128xbf16, #tpu.memory_space<vmem>>, vector<32x128xbf16>
    %c0_1 = arith.constant 0 : index
    %c0_2 = arith.constant 0 : index
    %1 = vector.load %arg2[%c0_1, %c0_2] : memref<64x32xbf16, #tpu.memory_space<vmem>>, vector<64x32xbf16>
    %cst = arith.constant dense<0.000000e+00> : vector<64x128xf32>
    %2 = tpu.matmul %1, %0, %cst {dimension_numbers = #tpu.dot_dimension_numbers<[1], [0], [0], [1], [0, 0, 1, 1], [], []>} : vector<64x32xbf16>, vector<32x128xbf16>, vector<64x128xf32> -> vector<64x128xf32>
    %c0_3 = arith.constant 0 : index
    %c0_4 = arith.constant 0 : index
    %3 = vector.load %arg3[%c0_3, %c0_4] : memref<64x1xf32, #tpu.memory_space<vmem>>, vector<64x1xf32>
    %4 = vector.broadcast %3 : vector<64x1xf32> to vector<64x128xf32>
    %5 = arith.addf %2, %4 : vector<64x128xf32>
    %cst_5 = arith.constant 0.000000e+00 : f32
    %6 = vector.broadcast %cst_5 : f32 to vector<64x128xf32>
    %7 = arith.maximumf %5, %6 : vector<64x128xf32>
    %8 = arith.truncf %7 : vector<64x128xf32> to vector<64x128xbf16>
    %c0_6 = arith.constant 0 : index
    %c0_7 = arith.constant 0 : index
    %9 = vector.load %arg4[%c0_6, %c0_7] : memref<128x64xbf16, #tpu.memory_space<vmem>>, vector<128x64xbf16>
    %cst_8 = arith.constant dense<0.000000e+00> : vector<128x128xf32>
    %10 = tpu.matmul %9, %8, %cst_8 {dimension_numbers = #tpu.dot_dimension_numbers<[1], [0], [0], [1], [0, 0, 1, 1], [], []>} : vector<128x64xbf16>, vector<64x128xbf16>, vector<128x128xf32> -> vector<128x128xf32>
    %c0_9 = arith.constant 0 : index
    %c0_10 = arith.constant 0 : index
    %11 = vector.load %arg5[%c0_9, %c0_10] : memref<128x1xf32, #tpu.memory_space<vmem>>, vector<128x1xf32>
    %12 = vector.broadcast %11 : vector<128x1xf32> to vector<128x128xf32>
    %13 = arith.addf %10, %12 : vector<128x128xf32>
    %cst_11 = arith.constant 0.000000e+00 : f32
    %14 = vector.broadcast %cst_11 : f32 to vector<128x128xf32>
    %15 = arith.maximumf %13, %14 : vector<128x128xf32>
    %16 = arith.truncf %15 : vector<128x128xf32> to vector<128x128xbf16>
    %c0_12 = arith.constant 0 : index
    %c0_13 = arith.constant 0 : index
    %17 = vector.load %arg6[%c0_12, %c0_13] : memref<64x128xbf16, #tpu.memory_space<vmem>>, vector<64x128xbf16>
    %cst_14 = arith.constant dense<0.000000e+00> : vector<64x128xf32>
    %18 = tpu.matmul %17, %16, %cst_14 {dimension_numbers = #tpu.dot_dimension_numbers<[1], [0], [0], [1], [0, 0, 1, 1], [], []>} : vector<64x128xbf16>, vector<128x128xbf16>, vector<64x128xf32> -> vector<64x128xf32>
    %c0_15 = arith.constant 0 : index
    %c0_16 = arith.constant 0 : index
    %19 = vector.load %arg7[%c0_15, %c0_16] : memref<64x1xf32, #tpu.memory_space<vmem>>, vector<64x1xf32>
    %20 = vector.broadcast %19 : vector<64x1xf32> to vector<64x128xf32>
    %21 = arith.addf %18, %20 : vector<64x128xf32>
    %cst_17 = arith.constant 0.000000e+00 : f32
    %22 = vector.broadcast %cst_17 : f32 to vector<64x128xf32>
    %23 = arith.maximumf %21, %22 : vector<64x128xf32>
    %c0_18 = arith.constant 0 : index
    %c0_19 = arith.constant 0 : index
    %24 = vector.load %arg8[%c0_18, %c0_19] : memref<64x1xf32, #tpu.memory_space<vmem>>, vector<64x1xf32>
    %25 = vector.broadcast %24 : vector<64x1xf32> to vector<64x128xf32>
    %26 = arith.mulf %23, %25 : vector<64x128xf32>
    %cst_20 = arith.constant dense<0.000000e+00> : vector<128xf32>
    %27 = vector.multi_reduction <add>, %26, %cst_20 [0] : vector<64x128xf32> to vector<128xf32>
    %28 = vector.shape_cast %27 : vector<128xf32> to vector<1x128xf32>
    %c0_21 = arith.constant 0 : index
    %c0_22 = arith.constant 0 : index
    %29 = vector.load %arg9[%c0_21, %c0_22] : memref<1x1xf32, #tpu.memory_space<vmem>>, vector<1x1xf32>
    %30 = vector.broadcast %29 : vector<1x1xf32> to vector<1x128xf32>
    %31 = arith.addf %28, %30 : vector<1x128xf32>
    %cst_23 = arith.constant 0.000000e+00 : f32
    %32 = vector.broadcast %cst_23 : f32 to vector<1x128xf32>
    %33 = arith.maximumf %31, %32 : vector<1x128xf32>
    %c0_24 = arith.constant 0 : index
    %c0_25 = arith.constant 0 : index
    %34 = vector.load %arg10[%c0_24, %c0_25] : memref<1x128xf32, #tpu.memory_space<vmem>>, vector<1x128xf32>
    tpu.vector_store %arg10[%c0_24, %c0_25], %33 {strides = array<i32>} : memref<1x128xf32, #tpu.memory_space<vmem>>, vector<1x128xf32>,
    return
  }
  func.func @transform_0(%arg0: i32) -> (i32, i32) {
    %c0_i32 = arith.constant 0 : i32
    %c0_i32_0 = arith.constant 0 : i32
    return %c0_i32, %arg0 : i32, i32
  }
  func.func @transform_1(%arg0: i32) -> (i32, i32) {
    %c0_i32 = arith.constant 0 : i32
    %c0_i32_0 = arith.constant 0 : i32
    %c0_i32_1 = arith.constant 0 : i32
    return %c0_i32, %c0_i32_0 : i32, i32
  }
  func.func @transform_2(%arg0: i32) -> (i32, i32) {
    %c0_i32 = arith.constant 0 : i32
    %c0_i32_0 = arith.constant 0 : i32
    %c0_i32_1 = arith.constant 0 : i32
    return %c0_i32, %c0_i32_0 : i32, i32
  }
  func.func @transform_3(%arg0: i32) -> (i32, i32) {
    %c0_i32 = arith.constant 0 : i32
    %c0_i32_0 = arith.constant 0 : i32
    %c0_i32_1 = arith.constant 0 : i32
    return %c0_i32, %c0_i32_0 : i32, i32
  }
  func.func @transform_4(%arg0: i32) -> (i32, i32) {
    %c0_i32 = arith.constant 0 : i32
    %c0_i32_0 = arith.constant 0 : i32
    %c0_i32_1 = arith.constant 0 : i32
    return %c0_i32, %c0_i32_0 : i32, i32
  }
  func.func @transform_5(%arg0: i32) -> (i32, i32) {
    %c0_i32 = arith.constant 0 : i32
    %c0_i32_0 = arith.constant 0 : i32
    %c0_i32_1 = arith.constant 0 : i32
    return %c0_i32, %c0_i32_0 : i32, i32
  }
  func.func @transform_6(%arg0: i32) -> (i32, i32) {
    %c0_i32 = arith.constant 0 : i32
    %c0_i32_0 = arith.constant 0 : i32
    %c0_i32_1 = arith.constant 0 : i32
    return %c0_i32, %c0_i32_0 : i32, i32
  }
  func.func @transform_7(%arg0: i32) -> (i32, i32) {
    %c0_i32 = arith.constant 0 : i32
    %c0_i32_0 = arith.constant 0 : i32
    %c0_i32_1 = arith.constant 0 : i32
    return %c0_i32, %c0_i32_0 : i32, i32
  }
  func.func @transform_8(%arg0: i32) -> (i32, i32) {
    %c0_i32 = arith.constant 0 : i32
    %c0_i32_0 = arith.constant 0 : i32
    %c0_i32_1 = arith.constant 0 : i32
    return %c0_i32, %c0_i32_0 : i32, i32
  }
  func.func @transform_9(%arg0: i32) -> (i32, i32) {
    %c0_i32 = arith.constant 0 : i32
    %c0_i32_0 = arith.constant 0 : i32
    return %c0_i32, %arg0 : i32, i32
  }
}

</mosaic_0001>

<llo_original>
// kernel: tpu_custom_call.1
$region0: #{tpu_custom_call.1}
  #allocation0 [shape = 'u32[]', space=smem, size = 0x4, offset = 0x4, fixed_abs, tag = 'smem constant byte address 0x4 - core index']
  #allocation1 [shape = 'u32[144,128]{1,0:T(1,128)}', space=vmem, size = 0x12000, scoped, tag = 'internal scratch']
  #allocation2 [shape = 'f32[1,1]{1,0:T(1,128)S(1)}', space=vmem, size = 0x200, scoped, tag = 'scoped memory for tpu_custom_call.1']
  %s0 = inlined_call_operand.vmem [shape: bf16[32,128], index: 0, kind: input, shape index: {}]
  %s1 = inlined_call_operand.vmem [shape: bf16[64,32], index: 1, kind: input, shape index: {}]
  %s2 = inlined_call_operand.vmem [shape: f32[64,1], index: 2, kind: input, shape index: {}]
  %s3 = inlined_call_operand.vmem [shape: bf16[128,64], index: 3, kind: input, shape index: {}]
  %s4 = inlined_call_operand.vmem [shape: f32[128,1], index: 4, kind: input, shape index: {}]
  %s5 = inlined_call_operand.vmem [shape: bf16[64,128], index: 5, kind: input, shape index: {}]
  %s6 = inlined_call_operand.vmem [shape: f32[64,1], index: 6, kind: input, shape index: {}]
  %s7 = inlined_call_operand.vmem [shape: f32[64,1], index: 7, kind: input, shape index: {}]
  %s8 = inlined_call_operand.<no memory space> [shape: f32[1,1], index: 8, kind: input, shape index: {}]
  %s9 = inlined_call_operand.hbm [shape: f32[1,128], index: 9, kind: output, shape index: {}]
  %s10 = sld [smem:[#allocation0]]
  $region46: #{tpu_custom_call.1} parent=0
    _
  %s12 = ssub.s32 1, %s10
  %s13 = scalar_select 0, %s12, %s10
  %v14 = vstv %s8
  %15 = vst [vmem:[#allocation2] sm:$0x1] %v14
  $region1: #{tpu_custom_call.1} parent=0
    #allocation3 [shape = 'u8[512]{0}', space=vmem, size = 0x400, scoped, tag = 'output window, operand 0, single buffered']
    #allocation4 [shape = 's32[1]{0}', space=sflag, size = 0x4, scoped, tag = 'scoped memory for tpu_custom_call.1']
    %16 = vsyncpa [#allocation4], 0
    // Predicated region
    $region2: #{tpu_custom_call.1} parent=1 // pred_check
      _
    $region3: #{tpu_custom_call.1} parent=1 // pred_check_branch
      %18 = sbr.rel (0) target = $region5
    $region4: #{tpu_custom_call.1} parent=1 // pred_region
      _
    $region5: #{tpu_custom_call.1} parent=1 // pred_fallthru
      _
    // Predicated region
    $region6: #{tpu_custom_call.1} parent=1 // pred_check
      _
    $region7: #{tpu_custom_call.1} parent=1 // pred_check_branch
      %20 = sbr.rel (0) target = $region9
    $region8: #{tpu_custom_call.1} parent=1 // pred_region
      _
    $region9: #{tpu_custom_call.1} parent=1 // pred_fallthru
      _
    // Predicated region
    $region10: #{tpu_custom_call.1} parent=1 // pred_check
      _
    $region11: #{tpu_custom_call.1} parent=1 // pred_check_branch
      %22 = sbr.rel (0) target = $region13
    $region12: #{tpu_custom_call.1} parent=1 // pred_region
      _
    $region13: #{tpu_custom_call.1} parent=1 // pred_fallthru
      _
    // Predicated region
    $region14: #{tpu_custom_call.1} parent=1 // pred_check
      _
    $region15: #{tpu_custom_call.1} parent=1 // pred_check_branch
      %24 = sbr.rel (0) target = $region17
    $region16: #{tpu_custom_call.1} parent=1 // pred_region
      _
    $region17: #{tpu_custom_call.1} parent=1 // pred_fallthru
      _
    // Predicated region
    $region18: #{tpu_custom_call.1} parent=1 // pred_check
      _
    $region19: #{tpu_custom_call.1} parent=1 // pred_check_branch
      %26 = sbr.rel (0) target = $region21
    $region20: #{tpu_custom_call.1} parent=1 // pred_region
      _
    $region21: #{tpu_custom_call.1} parent=1 // pred_fallthru
      _
    // Predicated region
    $region22: #{tpu_custom_call.1} parent=1 // pred_check
      _
    $region23: #{tpu_custom_call.1} parent=1 // pred_check_branch
      %28 = sbr.rel (0) target = $region25
    $region24: #{tpu_custom_call.1} parent=1 // pred_region
      _
    $region25: #{tpu_custom_call.1} parent=1 // pred_fallthru
      _
    // Predicated region
    $region26: #{tpu_custom_call.1} parent=1 // pred_check
      _
    $region27: #{tpu_custom_call.1} parent=1 // pred_check_branch
      %30 = sbr.rel (0) target = $region29
    $region28: #{tpu_custom_call.1} parent=1 // pred_region
      _
    $region29: #{tpu_custom_call.1} parent=1 // pred_fallthru
      _
    // Predicated region
    $region30: #{tpu_custom_call.1} parent=1 // pred_check
      _
    $region31: #{tpu_custom_call.1} parent=1 // pred_check_branch
      %32 = sbr.rel (0) target = $region33
    $region32: #{tpu_custom_call.1} parent=1 // pred_region
      _
    $region33: #{tpu_custom_call.1} parent=1 // pred_fallthru
      _
    // Predicated region
    $region34: #{tpu_custom_call.1} parent=1 // pred_check
      _
    $region35: #{tpu_custom_call.1} parent=1 // pred_check_branch
      %34 = sbr.rel (0) target = $region37
    $region36: #{tpu_custom_call.1} parent=1 // pred_region
      _
    $region37: #{tpu_custom_call.1} parent=1 // pred_fallthru
      _
    %v36 = vld [vmem:[%s0] sm:$0xf]
    %v37 = vld [vmem:[%s0 + $0x4] sm:$0xf]
    %v38 = vld [vmem:[%s0 + $0x8] sm:$0xf]
    %v39 = vld [vmem:[%s0 + $0xc] sm:$0xf]
    %v40 = vld [vmem:[%s1] sm:$0xf]
    %v41 = vld [vmem:[%s1 + $0x4] sm:$0xf]
    %v42 = vld [vmem:[%s1 + $0x8] sm:$0xf]
    %v43 = vld [vmem:[%s1 + $0xc] sm:$0xf]
    %v44 = vld [vmem:[%s1 + $0x10] sm:$0xf]
    %v45 = vld [vmem:[%s1 + $0x14] sm:$0xf]
    %v46 = vld [vmem:[%s1 + $0x18] sm:$0xf]
    %v47 = vld [vmem:[%s1 + $0x1c] sm:$0xf]
    %v48 = vld [vmem:[%s2] sm:$0xff]
    %v49 = vld [vmem:[%s2 + $0x8] sm:$0xff]
    %v50 = vld [vmem:[%s2 + $0x10] sm:$0xff]
    %v51 = vld [vmem:[%s2 + $0x18] sm:$0xff]
    %v52 = vld [vmem:[%s2 + $0x20] sm:$0xff]
    %v53 = vld [vmem:[%s2 + $0x28] sm:$0xff]
    %v54 = vld [vmem:[%s2 + $0x30] sm:$0xff]
    %v55 = vld [vmem:[%s2 + $0x38] sm:$0xff]
    %57 = vset.pattern.permute.xlu0 0
    %58 = vperm.xlu0 %57, %v48
    %v59 = vpop.permute.xlu0 %58
    %62 = vset.pattern.permute.xlu0 0
    %63 = vperm.xlu0 %62, %v49
    %v64 = vpop.permute.xlu0 %63
    %67 = vset.pattern.permute.xlu0 0
    %68 = vperm.xlu0 %67, %v50
    %v69 = vpop.permute.xlu0 %68
    %72 = vset.pattern.permute.xlu0 0
    %73 = vperm.xlu0 %72, %v51
    %v74 = vpop.permute.xlu0 %73
    %77 = vset.pattern.permute.xlu0 0
    %78 = vperm.xlu0 %77, %v52
    %v79 = vpop.permute.xlu0 %78
    %82 = vset.pattern.permute.xlu0 0
    %83 = vperm.xlu0 %82, %v53
    %v84 = vpop.permute.xlu0 %83
    %87 = vset.pattern.permute.xlu0 0
    %88 = vperm.xlu0 %87, %v54
    %v89 = vpop.permute.xlu0 %88
    %92 = vset.pattern.permute.xlu0 0
    %93 = vperm.xlu0 %92, %v55
    %v94 = vpop.permute.xlu0 %93
    %v104 = vunpack.c.l.b16 %v40
    %v105 = vunpack.c.l.b16 %v41
    %v106 = vunpack.c.l.b16 %v42
    %v107 = vunpack.c.l.b16 %v43
    %v108 = vunpack.c.l.b16 %v44
    %v109 = vunpack.c.l.b16 %v45
    %v110 = vunpack.c.l.b16 %v46
    %v111 = vunpack.c.l.b16 %v47
    %v112 = vpack.c.b16 %v105, %v104
    %v113 = vpack.c.b16 %v107, %v106
    %v114 = vpack.c.b16 %v109, %v108
    %v115 = vpack.c.b16 %v111, %v110
    %v120 = vunpack.c.l.b16 %v36
    %v121 = vunpack.c.l.b16 %v37
    %v122 = vunpack.c.l.b16 %v38
    %v123 = vunpack.c.l.b16 %v39
    %v124 = vpack.c.b16 %v121, %v120
    %v125 = vpack.c.b16 %v123, %v122
    %vm128 = vcmask 261120
    %v130 = vsel %vm128, %v112, 0
    %v133 = vsel %vm128, %v113, 0
    %v136 = vsel %vm128, %v114, 0
    %v139 = vsel %vm128, %v115, 0
    %141 = vmatprep.subr.bf16.mxu0 0
    %142 = vmatpush1.bf16.msra.mxu0 %v124
    %143 = vmatprep.subr.bf16.mxu0 0
    %144 = vmatpush1.bf16.msra.mxu0 %v125
    %145 = vmatprep.subr.bf16.mxu0 0
    %146 = vmatpush1.bf16.msra.mxu0 0
    %147 = vmatprep.subr.bf16.mxu0 0
    %148 = vmatpush1.bf16.msra.mxu0 0
    %149 = vmatprep.subr.bf16.mxu0 0
    %150 = vmatpush1.bf16.msra.mxu0 0
    %151 = vmatprep.subr.bf16.mxu0 0
    %152 = vmatpush1.bf16.msra.mxu0 0
    %153 = vmatprep.subr.bf16.mxu0 0
    %154 = vmatpush1.bf16.msra.mxu0 0
    %155 = vmatprep.subr.bf16.mxu0 0
    %156 = vmatpush1.bf16.msra.mxu0 0
    %157 = vmatprep.subr.bf16.mxu0 0
    %158 = vmatpush1.bf16.msra.mxu0 0
    %159 = vmatprep.subr.bf16.mxu0 0
    %160 = vmatpush1.bf16.msra.mxu0 0
    %161 = vmatprep.subr.bf16.mxu0 0
    %162 = vmatpush1.bf16.msra.mxu0 0
    %163 = vmatprep.subr.bf16.mxu0 0
    %164 = vmatpush1.bf16.msra.mxu0 0
    %165 = vmatprep.subr.bf16.mxu0 0
    %166 = vmatpush1.bf16.msra.mxu0 0
    %167 = vmatprep.subr.bf16.mxu0 0
    %168 = vmatpush1.bf16.msra.mxu0 0
    %169 = vmatprep.subr.bf16.mxu0 0
    %170 = vmatpush1.bf16.msra.mxu0 0
    %171 = vmatprep.subr.bf16.mxu0 0
    %172 = vmatpush1.bf16.msra.mxu0 0
    %173 = vmatprep.mubr.bf16.mxu0 0
    %174 = vmatmul.mubr.bf16.gmra.mrb[0].mxu0 %v130
    %v175 = vpop.f32.mrb[0].mxu0
    %v176 = vadd.f32 %v59, %v175
    %v177 = vpop.f32.mrb[0].mxu0
    %v178 = vpop.f32.mrb[0].mxu0
    %v179 = vadd.f32 %v64, %v178
    %v180 = vpop.f32.mrb[0].mxu0
    %181 = vmatprep.mubr.bf16.mxu0 0
    %182 = vmatmul.mubr.bf16.gmra.mrb[0].mxu0 %v133
    %v183 = vpop.f32.mrb[0].mxu0
    %v184 = vadd.f32 %v69, %v183
    %v185 = vpop.f32.mrb[0].mxu0
    %v186 = vpop.f32.mrb[0].mxu0
    %v187 = vadd.f32 %v74, %v186
    %v188 = vpop.f32.mrb[0].mxu0
    %189 = vmatprep.mubr.bf16.mxu0 0
    %190 = vmatmul.mubr.bf16.gmra.mrb[0].mxu0 %v136
    %v191 = vpop.f32.mrb[0].mxu0
    %v192 = vadd.f32 %v79, %v191
    %v193 = vpop.f32.mrb[0].mxu0
    %v194 = vpop.f32.mrb[0].mxu0
    %v195 = vadd.f32 %v84, %v194
    %v196 = vpop.f32.mrb[0].mxu0
    %197 = vmatprep.mubr.bf16.mxu0 0
    %198 = vmatmul.mubr.bf16.gmra.mrb[0].mxu0 %v139
    %v199 = vpop.f32.mrb[0].mxu0
    %v200 = vadd.f32 %v89, %v199
    %v201 = vpop.f32.mrb[0].mxu0
    %v202 = vpop.f32.mrb[0].mxu0
    %v203 = vadd.f32 %v94, %v202
    %v204 = vpop.f32.mrb[0].mxu0
    %205 = vdwg.mxu0
    %v206 = vmax.f32 %v176, 0.0
    %v207 = vmax.f32 %v179, 0.0
    %v208 = vmax.f32 %v184, 0.0
    %v209 = vmax.f32 %v187, 0.0
    %v210 = vmax.f32 %v192, 0.0
    %v211 = vmax.f32 %v195, 0.0
    %v212 = vmax.f32 %v200, 0.0
    %v213 = vmax.f32 %v203, 0.0
    %v214 = vpack.c.bf16 %v207, %v206
    %v215 = vpack.c.bf16 %v209, %v208
    %v216 = vpack.c.bf16 %v211, %v210
    %v217 = vpack.c.bf16 %v213, %v212
    %v218 = vld [vmem:[%s3] sm:$0xf]
    %v219 = vld [vmem:[%s3 + $0x4] sm:$0xf]
    %v220 = vld [vmem:[%s3 + $0x8] sm:$0xf]
    %v221 = vld [vmem:[%s3 + $0xc] sm:$0xf]
    %v222 = vld [vmem:[%s3 + $0x10] sm:$0xf]
    %v223 = vld [vmem:[%s3 + $0x14] sm:$0xf]
    %v224 = vld [vmem:[%s3 + $0x18] sm:$0xf]
    %v225 = vld [vmem:[%s3 + $0x1c] sm:$0xf]
    %v226 = vld [vmem:[%s3 + $0x20] sm:$0xf]
    %v227 = vld [vmem:[%s3 + $0x24] sm:$0xf]
    %v228 = vld [vmem:[%s3 + $0x28] sm:$0xf]
    %v229 = vld [vmem:[%s3 + $0x2c] sm:$0xf]
    %v230 = vld [vmem:[%s3 + $0x30] sm:$0xf]
    %v231 = vld [vmem:[%s3 + $0x34] sm:$0xf]
    %v232 = vld [vmem:[%s3 + $0x38] sm:$0xf]
    %v233 = vld [vmem:[%s3 + $0x3c] sm:$0xf]
    %v234 = vld [vmem:[%s4] sm:$0xff]
    %v235 = vld [vmem:[%s4 + $0x8] sm:$0xff]
    %v236 = vld [vmem:[%s4 + $0x10] sm:$0xff]
    %v237 = vld [vmem:[%s4 + $0x18] sm:$0xff]
    %v238 = vld [vmem:[%s4 + $0x20] sm:$0xff]
    %v239 = vld [vmem:[%s4 + $0x28] sm:$0xff]
    %v240 = vld [vmem:[%s4 + $0x30] sm:$0xff]
    %v241 = vld [vmem:[%s4 + $0x38] sm:$0xff]
    %v242 = vld [vmem:[%s4 + $0x40] sm:$0xff]
    %v243 = vld [vmem:[%s4 + $0x48] sm:$0xff]
    %v244 = vld [vmem:[%s4 + $0x50] sm:$0xff]
    %v245 = vld [vmem:[%s4 + $0x58] sm:$0xff]
    %v246 = vld [vmem:[%s4 + $0x60] sm:$0xff]
    %v247 = vld [vmem:[%s4 + $0x68] sm:$0xff]
    %v248 = vld [vmem:[%s4 + $0x70] sm:$0xff]
    %v249 = vld [vmem:[%s4 + $0x78] sm:$0xff]
    %251 = vset.pattern.permute.xlu0 0
    %252 = vperm.xlu0 %251, %v234
    %v253 = vpop.permute.xlu0 %252
    %256 = vset.pattern.permute.xlu0 0
    %257 = vperm.xlu0 %256, %v235
    %v258 = vpop.permute.xlu0 %257
    %261 = vset.pattern.permute.xlu0 0
    %262 = vperm.xlu0 %261, %v236
    %v263 = vpop.permute.xlu0 %262
    %266 = vset.pattern.permute.xlu0 0
    %267 = vperm.xlu0 %266, %v237
    %v268 = vpop.permute.xlu0 %267
    %271 = vset.pattern.permute.xlu0 0
    %272 = vperm.xlu0 %271, %v238
    %v273 = vpop.permute.xlu0 %272
    %276 = vset.pattern.permute.xlu0 0
    %277 = vperm.xlu0 %276, %v239
    %v278 = vpop.permute.xlu0 %277
    %281 = vset.pattern.permute.xlu0 0
    %282 = vperm.xlu0 %281, %v240
    %v283 = vpop.permute.xlu0 %282
    %286 = vset.pattern.permute.xlu0 0
    %287 = vperm.xlu0 %286, %v241
    %v288 = vpop.permute.xlu0 %287
    %291 = vset.pattern.permute.xlu0 0
    %292 = vperm.xlu0 %291, %v242
    %v293 = vpop.permute.xlu0 %292
    %296 = vset.pattern.permute.xlu0 0
    %297 = vperm.xlu0 %296, %v243
    %v298 = vpop.permute.xlu0 %297
    %301 = vset.pattern.permute.xlu0 0
    %302 = vperm.xlu0 %301, %v244
    %v303 = vpop.permute.xlu0 %302
    %306 = vset.pattern.permute.xlu0 0
    %307 = vperm.xlu0 %306, %v245
    %v308 = vpop.permute.xlu0 %307
    %311 = vset.pattern.permute.xlu0 0
    %312 = vperm.xlu0 %311, %v246
    %v313 = vpop.permute.xlu0 %312
    %316 = vset.pattern.permute.xlu0 0
    %317 = vperm.xlu0 %316, %v247
    %v318 = vpop.permute.xlu0 %317
    %321 = vset.pattern.permute.xlu0 0
    %322 = vperm.xlu0 %321, %v248
    %v323 = vpop.permute.xlu0 %322
    %326 = vset.pattern.permute.xlu0 0
    %327 = vperm.xlu0 %326, %v249
    %v328 = vpop.permute.xlu0 %327
    %v346 = vunpack.c.l.b16 %v218
    %v347 = vunpack.c.l.b16 %v219
    %v348 = vunpack.c.l.b16 %v220
    %v349 = vunpack.c.l.b16 %v221
    %v350 = vunpack.c.l.b16 %v222
    %v351 = vunpack.c.l.b16 %v223
    %v352 = vunpack.c.l.b16 %v224
    %v353 = vunpack.c.l.b16 %v225
    %v354 = vunpack.c.l.b16 %v226
    %v355 = vunpack.c.l.b16 %v227
    %v356 = vunpack.c.l.b16 %v228
    %v357 = vunpack.c.l.b16 %v229
    %v358 = vunpack.c.l.b16 %v230
    %v359 = vunpack.c.l.b16 %v231
    %v360 = vunpack.c.l.b16 %v232
    %v361 = vunpack.c.l.b16 %v233
    %v362 = vpack.c.b16 %v347, %v346
    %v363 = vpack.c.b16 %v349, %v348
    %v364 = vpack.c.b16 %v351, %v350
    %v365 = vpack.c.b16 %v353, %v352
    %v366 = vpack.c.b16 %v355, %v354
    %v367 = vpack.c.b16 %v357, %v356
    %v368 = vpack.c.b16 %v359, %v358
    %v369 = vpack.c.b16 %v361, %v360
    %vm370 = vcmask 523264
    %v372 = vsel %vm370, %v362, 0
    %v375 = vsel %vm370, %v363, 0
    %v378 = vsel %vm370, %v364, 0
    %v381 = vsel %vm370, %v365, 0
    %v384 = vsel %vm370, %v366, 0
    %v387 = vsel %vm370, %v367, 0
    %v390 = vsel %vm370, %v368, 0
    %v393 = vsel %vm370, %v369, 0
    %395 = vmatprep.subr.bf16.mxu0 0
    %396 = vmatpush1.bf16.msra.mxu0 %v214
    %397 = vmatprep.subr.bf16.mxu0 0
    %398 = vmatpush1.bf16.msra.mxu0 %v215
    %399 = vmatprep.subr.bf16.mxu0 0
    %400 = vmatpush1.bf16.msra.mxu0 %v216
    %401 = vmatprep.subr.bf16.mxu0 0
    %402 = vmatpush1.bf16.msra.mxu0 %v217
    %403 = vmatprep.subr.bf16.mxu0 0
    %404 = vmatpush1.bf16.msra.mxu0 0
    %405 = vmatprep.subr.bf16.mxu0 0
    %406 = vmatpush1.bf16.msra.mxu0 0
    %407 = vmatprep.subr.bf16.mxu0 0
    %408 = vmatpush1.bf16.msra.mxu0 0
    %409 = vmatprep.subr.bf16.mxu0 0
    %410 = vmatpush1.bf16.msra.mxu0 0
    %411 = vmatprep.subr.bf16.mxu0 0
    %412 = vmatpush1.bf16.msra.mxu0 0
    %413 = vmatprep.subr.bf16.mxu0 0
    %414 = vmatpush1.bf16.msra.mxu0 0
    %415 = vmatprep.subr.bf16.mxu0 0
    %416 = vmatpush1.bf16.msra.mxu0 0
    %417 = vmatprep.subr.bf16.mxu0 0
    %418 = vmatpush1.bf16.msra.mxu0 0
    %419 = vmatprep.subr.bf16.mxu0 0
    %420 = vmatpush1.bf16.msra.mxu0 0
    %421 = vmatprep.subr.bf16.mxu0 0
    %422 = vmatpush1.bf16.msra.mxu0 0
    %423 = vmatprep.subr.bf16.mxu0 0
    %424 = vmatpush1.bf16.msra.mxu0 0
    %425 = vmatprep.subr.bf16.mxu0 0
    %426 = vmatpush1.bf16.msra.mxu0 0
    %427 = vmatprep.mubr.bf16.mxu0 0
    %428 = vmatmul.mubr.bf16.gmra.mrb[0].mxu0 %v372
    %v429 = vpop.f32.mrb[0].mxu0
    %v430 = vadd.f32 %v253, %v429
    %v431 = vpop.f32.mrb[0].mxu0
    %v432 = vpop.f32.mrb[0].mxu0
    %v433 = vadd.f32 %v258, %v432
    %v434 = vpop.f32.mrb[0].mxu0
    %435 = vmatprep.mubr.bf16.mxu0 0
    %436 = vmatmul.mubr.bf16.gmra.mrb[0].mxu0 %v375
    %v437 = vpop.f32.mrb[0].mxu0
    %v438 = vadd.f32 %v263, %v437
    %v439 = vpop.f32.mrb[0].mxu0
    %v440 = vpop.f32.mrb[0].mxu0
    %v441 = vadd.f32 %v268, %v440
    %v442 = vpop.f32.mrb[0].mxu0
    %443 = vmatprep.mubr.bf16.mxu0 0
    %444 = vmatmul.mubr.bf16.gmra.mrb[0].mxu0 %v378
    %v445 = vpop.f32.mrb[0].mxu0
    %v446 = vadd.f32 %v273, %v445
    %v447 = vpop.f32.mrb[0].mxu0
    %v448 = vpop.f32.mrb[0].mxu0
    %v449 = vadd.f32 %v278, %v448
    %v450 = vpop.f32.mrb[0].mxu0
    %451 = vmatprep.mubr.bf16.mxu0 0
    %452 = vmatmul.mubr.bf16.gmra.mrb[0].mxu0 %v381
    %v453 = vpop.f32.mrb[0].mxu0
    %v454 = vadd.f32 %v283, %v453
    %v455 = vpop.f32.mrb[0].mxu0
    %v456 = vpop.f32.mrb[0].mxu0
    %v457 = vadd.f32 %v288, %v456
    %v458 = vpop.f32.mrb[0].mxu0
    %459 = vmatprep.mubr.bf16.mxu0 0
    %460 = vmatmul.mubr.bf16.gmra.mrb[0].mxu0 %v384
    %v461 = vpop.f32.mrb[0].mxu0
    %v462 = vadd.f32 %v293, %v461
    %v463 = vpop.f32.mrb[0].mxu0
    %v464 = vpop.f32.mrb[0].mxu0
    %v465 = vadd.f32 %v298, %v464
    %v466 = vpop.f32.mrb[0].mxu0
    %467 = vmatprep.mubr.bf16.mxu0 0
    %468 = vmatmul.mubr.bf16.gmra.mrb[0].mxu0 %v387
    %v469 = vpop.f32.mrb[0].mxu0
    %v470 = vadd.f32 %v303, %v469
    %v471 = vpop.f32.mrb[0].mxu0
    %v472 = vpop.f32.mrb[0].mxu0
    %v473 = vadd.f32 %v308, %v472
    %v474 = vpop.f32.mrb[0].mxu0
    %475 = vmatprep.mubr.bf16.mxu0 0
    %476 = vmatmul.mubr.bf16.gmra.mrb[0].mxu0 %v390
    %v477 = vpop.f32.mrb[0].mxu0
    %v478 = vadd.f32 %v313, %v477
    %v479 = vpop.f32.mrb[0].mxu0
    %v480 = vpop.f32.mrb[0].mxu0
    %v481 = vadd.f32 %v318, %v480
    %v482 = vpop.f32.mrb[0].mxu0
    %483 = vmatprep.mubr.bf16.mxu0 0
    %484 = vmatmul.mubr.bf16.gmra.mrb[0].mxu0 %v393
    %v485 = vpop.f32.mrb[0].mxu0
    %v486 = vadd.f32 %v323, %v485
    %v487 = vpop.f32.mrb[0].mxu0
    %v488 = vpop.f32.mrb[0].mxu0
    %v489 = vadd.f32 %v328, %v488
    %v490 = vpop.f32.mrb[0].mxu0
    %491 = vdwg.mxu0
    %v492 = vmax.f32 %v430, 0.0
    %v493 = vmax.f32 %v433, 0.0
    %v494 = vmax.f32 %v438, 0.0
    %v495 = vmax.f32 %v441, 0.0
    %v496 = vmax.f32 %v446, 0.0
    %v497 = vmax.f32 %v449, 0.0
    %v498 = vmax.f32 %v454, 0.0
    %v499 = vmax.f32 %v457, 0.0
    %v500 = vmax.f32 %v462, 0.0
    %v501 = vmax.f32 %v465, 0.0
    %v502 = vmax.f32 %v470, 0.0
    %v503 = vmax.f32 %v473, 0.0
    %v504 = vmax.f32 %v478, 0.0
    %v505 = vmax.f32 %v481, 0.0
    %v506 = vmax.f32 %v486, 0.0
    %v507 = vmax.f32 %v489, 0.0
    %v508 = vpack.c.bf16 %v493, %v492
    %v509 = vpack.c.bf16 %v495, %v494
    %v510 = vpack.c.bf16 %v497, %v496
    %v511 = vpack.c.bf16 %v499, %v498
    %v512 = vpack.c.bf16 %v501, %v500
    %v513 = vpack.c.bf16 %v503, %v502
    %v514 = vpack.c.bf16 %v505, %v504
    %v515 = vpack.c.bf16 %v507, %v506
    %v516 = vld [vmem:[%s5] sm:$0xf]
    %v517 = vld [vmem:[%s5 + $0x4] sm:$0xf]
    %v518 = vld [vmem:[%s5 + $0x8] sm:$0xf]
    %v519 = vld [vmem:[%s5 + $0xc] sm:$0xf]
    %v520 = vld [vmem:[%s5 + $0x10] sm:$0xf]
    %v521 = vld [vmem:[%s5 + $0x14] sm:$0xf]
    %v522 = vld [vmem:[%s5 + $0x18] sm:$0xf]
    %v523 = vld [vmem:[%s5 + $0x1c] sm:$0xf]
    %v524 = vld [vmem:[%s6] sm:$0xff]
    %v525 = vld [vmem:[%s6 + $0x8] sm:$0xff]
    %v526 = vld [vmem:[%s6 + $0x10] sm:$0xff]
    %v527 = vld [vmem:[%s6 + $0x18] sm:$0xff]
    %v528 = vld [vmem:[%s6 + $0x20] sm:$0xff]
    %v529 = vld [vmem:[%s6 + $0x28] sm:$0xff]
    %v530 = vld [vmem:[%s6 + $0x30] sm:$0xff]
    %v531 = vld [vmem:[%s6 + $0x38] sm:$0xff]
    %533 = vset.pattern.permute.xlu0 0
    %534 = vperm.xlu0 %533, %v524
    %v535 = vpop.permute.xlu0 %534
    %538 = vset.pattern.permute.xlu0 0
    %539 = vperm.xlu0 %538, %v525
    %v540 = vpop.permute.xlu0 %539
    %543 = vset.pattern.permute.xlu0 0
    %544 = vperm.xlu0 %543, %v526
    %v545 = vpop.permute.xlu0 %544
    %548 = vset.pattern.permute.xlu0 0
    %549 = vperm.xlu0 %548, %v527
    %v550 = vpop.permute.xlu0 %549
    %553 = vset.pattern.permute.xlu0 0
    %554 = vperm.xlu0 %553, %v528
    %v555 = vpop.permute.xlu0 %554
    %558 = vset.pattern.permute.xlu0 0
    %559 = vperm.xlu0 %558, %v529
    %v560 = vpop.permute.xlu0 %559
    %563 = vset.pattern.permute.xlu0 0
    %564 = vperm.xlu0 %563, %v530
    %v565 = vpop.permute.xlu0 %564
    %568 = vset.pattern.permute.xlu0 0
    %569 = vperm.xlu0 %568, %v531
    %v570 = vpop.permute.xlu0 %569
    %v580 = vunpack.c.l.b16 %v516
    %v581 = vunpack.c.l.b16 %v517
    %v582 = vunpack.c.l.b16 %v518
    %v583 = vunpack.c.l.b16 %v519
    %v584 = vunpack.c.l.b16 %v520
    %v585 = vunpack.c.l.b16 %v521
    %v586 = vunpack.c.l.b16 %v522
    %v587 = vunpack.c.l.b16 %v523
    %v588 = vpack.c.b16 %v581, %v580
    %v589 = vpack.c.b16 %v583, %v582
    %v590 = vpack.c.b16 %v585, %v584
    %v591 = vpack.c.b16 %v587, %v586
    %596 = vmatprep.subr.bf16.mxu0 0
    %597 = vmatpush1.bf16.msra.mxu0 %v508
    %598 = vmatprep.subr.bf16.mxu0 0
    %599 = vmatpush1.bf16.msra.mxu0 %v509
    %600 = vmatprep.subr.bf16.mxu0 0
    %601 = vmatpush1.bf16.msra.mxu0 %v510
    %602 = vmatprep.subr.bf16.mxu0 0
    %603 = vmatpush1.bf16.msra.mxu0 %v511
    %604 = vmatprep.subr.bf16.mxu0 0
    %605 = vmatpush1.bf16.msra.mxu0 %v512
    %606 = vmatprep.subr.bf16.mxu0 0
    %607 = vmatpush1.bf16.msra.mxu0 %v513
    %608 = vmatprep.subr.bf16.mxu0 0
    %609 = vmatpush1.bf16.msra.mxu0 %v514
    %610 = vmatprep.subr.bf16.mxu0 0
    %611 = vmatpush1.bf16.msra.mxu0 %v515
    %612 = vmatprep.subr.bf16.mxu0 0
    %613 = vmatpush1.bf16.msra.mxu0 0
    %614 = vmatprep.subr.bf16.mxu0 0
    %615 = vmatpush1.bf16.msra.mxu0 0
    %616 = vmatprep.subr.bf16.mxu0 0
    %617 = vmatpush1.bf16.msra.mxu0 0
    %618 = vmatprep.subr.bf16.mxu0 0
    %619 = vmatpush1.bf16.msra.mxu0 0
    %620 = vmatprep.subr.bf16.mxu0 0
    %621 = vmatpush1.bf16.msra.mxu0 0
    %622 = vmatprep.subr.bf16.mxu0 0
    %623 = vmatpush1.bf16.msra.mxu0 0
    %624 = vmatprep.subr.bf16.mxu0 0
    %625 = vmatpush1.bf16.msra.mxu0 0
    %626 = vmatprep.subr.bf16.mxu0 0
    %627 = vmatpush1.bf16.msra.mxu0 0
    %628 = vmatprep.mubr.bf16.mxu0 0
    %629 = vmatmul.mubr.bf16.gmra.mrb[0].mxu0 %v588
    %v630 = vpop.f32.mrb[0].mxu0
    %v631 = vadd.f32 %v535, %v630
    %v632 = vpop.f32.mrb[0].mxu0
    %v633 = vpop.f32.mrb[0].mxu0
    %v634 = vadd.f32 %v540, %v633
    %v635 = vpop.f32.mrb[0].mxu0
    %636 = vmatprep.mubr.bf16.mxu0 0
    %637 = vmatmul.mubr.bf16.gmra.mrb[0].mxu0 %v589
    %v638 = vpop.f32.mrb[0].mxu0
    %v639 = vadd.f32 %v545, %v638
    %v640 = vpop.f32.mrb[0].mxu0
    %v641 = vpop.f32.mrb[0].mxu0
    %v642 = vadd.f32 %v550, %v641
    %v643 = vpop.f32.mrb[0].mxu0
    %644 = vmatprep.mubr.bf16.mxu0 0
    %645 = vmatmul.mubr.bf16.gmra.mrb[0].mxu0 %v590
    %v646 = vpop.f32.mrb[0].mxu0
    %v647 = vadd.f32 %v555, %v646
    %v648 = vpop.f32.mrb[0].mxu0
    %v649 = vpop.f32.mrb[0].mxu0
    %v650 = vadd.f32 %v560, %v649
    %v651 = vpop.f32.mrb[0].mxu0
    %652 = vmatprep.mubr.bf16.mxu0 0
    %653 = vmatmul.mubr.bf16.gmra.mrb[0].mxu0 %v591
    %v654 = vpop.f32.mrb[0].mxu0
    %v655 = vadd.f32 %v565, %v654
    %v656 = vpop.f32.mrb[0].mxu0
    %v657 = vpop.f32.mrb[0].mxu0
    %v658 = vadd.f32 %v570, %v657
    %v659 = vpop.f32.mrb[0].mxu0
    %660 = vdwg.mxu0
    %v661 = vmax.f32 %v631, 0.0
    %v662 = vmax.f32 %v634, 0.0
    %v663 = vmax.f32 %v639, 0.0
    %v664 = vmax.f32 %v642, 0.0
    %v665 = vmax.f32 %v647, 0.0
    %v666 = vmax.f32 %v650, 0.0
    %v667 = vmax.f32 %v655, 0.0
    %v668 = vmax.f32 %v658, 0.0
    %v669 = vld [vmem:[%s7] sm:$0xff]
    %v670 = vld [vmem:[%s7 + $0x8] sm:$0xff]
    %v671 = vld [vmem:[%s7 + $0x10] sm:$0xff]
    %v672 = vld [vmem:[%s7 + $0x18] sm:$0xff]
    %v673 = vld [vmem:[%s7 + $0x20] sm:$0xff]
    %v674 = vld [vmem:[%s7 + $0x28] sm:$0xff]
    %v675 = vld [vmem:[%s7 + $0x30] sm:$0xff]
    %v676 = vld [vmem:[%s7 + $0x38] sm:$0xff]
    %678 = vset.pattern.permute.xlu0 0
    %679 = vperm.xlu0 %678, %v669
    %v680 = vpop.permute.xlu0 %679
    %683 = vset.pattern.permute.xlu0 0
    %684 = vperm.xlu0 %683, %v670
    %v685 = vpop.permute.xlu0 %684
    %688 = vset.pattern.permute.xlu0 0
    %689 = vperm.xlu0 %688, %v671
    %v690 = vpop.permute.xlu0 %689
    %693 = vset.pattern.permute.xlu0 0
    %694 = vperm.xlu0 %693, %v672
    %v695 = vpop.permute.xlu0 %694
    %698 = vset.pattern.permute.xlu0 0
    %699 = vperm.xlu0 %698, %v673
    %v700 = vpop.permute.xlu0 %699
    %703 = vset.pattern.permute.xlu0 0
    %704 = vperm.xlu0 %703, %v674
    %v705 = vpop.permute.xlu0 %704
    %708 = vset.pattern.permute.xlu0 0
    %709 = vperm.xlu0 %708, %v675
    %v710 = vpop.permute.xlu0 %709
    %713 = vset.pattern.permute.xlu0 0
    %714 = vperm.xlu0 %713, %v676
    %v715 = vpop.permute.xlu0 %714
    %v717 = vmul.f32 %v661, %v680
    %v718 = vmul.f32 %v662, %v685
    %v719 = vmul.f32 %v663, %v690
    %v720 = vmul.f32 %v664, %v695
    %v721 = vmul.f32 %v665, %v700
    %v722 = vmul.f32 %v666, %v705
    %v723 = vmul.f32 %v667, %v710
    %v724 = vmul.f32 %v668, %v715
    %v725 = vadd.f32 %v717, %v718
    %v726 = vadd.f32 %v725, %v719
    %v727 = vadd.f32 %v726, %v720
    %v728 = vadd.f32 %v727, %v721
    %v729 = vadd.f32 %v728, %v722
    %v730 = vadd.f32 %v729, %v723
    %v731 = vadd.f32 %v730, %v724
    %v732 = vrot.slane %v731, 4
    %v733 = vadd.f32 %v731, %v732
    %v734 = vrot.slane %v733, 2
    %v735 = vadd.f32 %v733, %v734
    %v736 = vrot.slane %v735, 1
    %v737 = vadd.f32 %v735, %v736
    %v738 = vld [vmem:[#allocation2] sm:$0x1]
    %740 = vset.pattern.permute.xlu0 0
    %741 = vperm.xlu0 %740, %v738
    %v742 = vpop.permute.xlu0 %741
    %v744 = vlaneseq
    %v745 = vshrl.u32 %v744, 7
    %v746 = vsub.s32 0, %v745
    %v747 = vrot.slane %v742, %v746
    %v748 = vadd.f32 %v737, %v747
    %v749 = vmax.f32 %v748, 0.0
    %750 = vst [vmem:[#allocation3] sm:$0x1] %v749
    // Predicated region
    $region38: #{tpu_custom_call.1} parent=1 // pred_check
      _
    $region39: #{tpu_custom_call.1} parent=1 // pred_check_branch
      %752 = sbr.rel (0) target = $region41
    $region40: #{tpu_custom_call.1} parent=1 // pred_region
      %s754 = ssub.s32 16, 16
      %755 = vsyncadd [#allocation4], %s754
      %s757 = sshll.u32 [#allocation3], 4
      %s758 = int_to_ptr.vmem [resolvable:$true] %s757
      %760 = dma.vmem_to_hbm [thread:$0]  %s758, 16, %s9, [#allocation4]
    $region41: #{tpu_custom_call.1} parent=1 // pred_fallthru
      _
    // Predicated region
    $region42: #{tpu_custom_call.1} parent=1 // pred_check
      _
    $region43: #{tpu_custom_call.1} parent=1 // pred_check_branch
      %762 = sbr.rel (0) target = $region45
    $region44: #{tpu_custom_call.1} parent=1 // pred_region
      %763 = dma.done [#allocation4], 16
    $region45: #{tpu_custom_call.1} parent=1 // pred_fallthru
      _
    %764 = vsyncpa [#allocation4], 1

</llo_original>
